<compile_context>
chip_gen: v6e
topology: v6e:2x2x1
jax: 0.10.0
libtpu: 0.0.40
codegen_flags: <defaults>
</compile_context>

<pallas_src>
import jax
import jax.numpy as jnp
from jax.experimental import pallas as pl
from jax.experimental.pallas import tpu as pltpu


def _round_up(n, m):
    return ((n + m - 1) // m) * m


def _lane_pad(n):
    # Last-dim VMEM footprint is padded to 128 lanes regardless of C.
    return _round_up(n, 128)


def _sublane_align(dtype):
    # Rows per packed sublane tile: f32 -> 8, bf16 -> 16, int8/fp8 -> 32.
    return 8 * max(1, 4 // jnp.dtype(dtype).itemsize)


def edge_mlp_kernel(pre_ref, ea_ref, w3_ref, b_ref, o_ref):
    """o = relu(pre + edge_attr @ W3 + b), with f32 accumulation."""
    acc = jnp.dot(ea_ref[...], w3_ref[...], preferred_element_type=jnp.float32)
    acc = acc + pre_ref[...].astype(jnp.float32) + b_ref[...]
    o_ref[...] = jnp.maximum(acc, 0.0).astype(o_ref.dtype)
    # TODO(synk): training-mode dropout (pltpu.prng_seed + stateful_bernoulli)
    # is omitted — forward here is eval-mode where F.dropout is identity.


def _vmem_bytes(tile_e, C_out, Ce_in, in_itemsize, out_itemsize):
    """Double-buffered VMEM footprint, accounting for 128-lane padding."""
    per_row = ((_lane_pad(C_out) + _lane_pad(Ce_in)) * in_itemsize
               + _lane_pad(C_out) * out_itemsize)
    fixed = _lane_pad(C_out) * (_round_up(Ce_in, 8) * in_itemsize + 4)   # W3 + bias
    return 2 * (tile_e * per_row + fixed)


def _pick_tile_e(C_out, Ce_in, in_itemsize, out_itemsize, budget_bytes,
                 max_tile=16384):
    """Largest edge tile whose double-buffered, lane-padded footprint fits."""
    per_row = 2 * ((_lane_pad(C_out) + _lane_pad(Ce_in)) * in_itemsize
                   + _lane_pad(C_out) * out_itemsize)
    fixed = 2 * _lane_pad(C_out) * (_round_up(Ce_in, 8) * in_itemsize + 4)
    tile = (budget_bytes - fixed) // max(per_row, 1)
    return int(max(8, min(max_tile, tile)))


def edge_mlp_forward(x, edge_index, edge_attr, params, *,
                     tile_e=None, compute_dtype=jnp.float32,
                     out_dtype=None, eps=1e-5):
    if out_dtype is None:
        out_dtype = compute_dtype

    # --- fold eval-mode BatchNorm (running stats) + Linear bias -------------
    scale = params["gamma"] * jax.lax.rsqrt(params["var"] + eps)         # (C_out,)
    w_eff = params["w"] * scale[None, :]                                 # (F_in, C_out)
    b_eff = (params["b"] - params["mean"]) * scale + params["beta"]      # (C_out,)

    Cv = x.shape[-1]
    E, Ce_in = edge_attr.shape
    C_out = w_eff.shape[1]

    # --- split the linear: node part pre-projected once per node (tiny) -----
    w1 = w_eff[:Cv].astype(compute_dtype)                                # (Cv, C_out)
    w2 = w_eff[Cv:2 * Cv].astype(compute_dtype)                          # (Cv, C_out)
    w3 = w_eff[2 * Cv:].astype(compute_dtype)                            # (Ce_in, C_out)

    x_c = x.astype(compute_dtype)                                        # cast before glue
    p_row = x_c @ w1                                                     # (N, C_out)
    p_col = x_c @ w2                                                     # (N, C_out)
    row, col = edge_index[0], edge_index[1]
    pre = (p_row[row] + p_col[col]).astype(compute_dtype)                # (E, C_out)
    ea = edge_attr.astype(compute_dtype)                                 # (E, Ce_in)
    bias = b_eff.reshape(1, C_out).astype(jnp.float32)                   # f32 on the acc

    in_itemsize = jnp.dtype(compute_dtype).itemsize
    out_itemsize = jnp.dtype(out_dtype).itemsize
    row_align = max(_sublane_align(compute_dtype), _sublane_align(out_dtype))

    # --- generation-aware VMEM budget / tile sizing --------------------------
    try:
        vmem_cap = int(pltpu.get_tpu_info().vmem_capacity_bytes)
    except Exception:
        vmem_cap = 64 << 20                      # conservative (v7x-sized) fallback
    budget = (vmem_cap * 3) // 8                 # ~24 MiB on v7x, ~48 MiB on v5e/v6e
    ceiling = (vmem_cap * 3) // 4                # vmem_limit cap: leave scratch headroom

    if tile_e is None:
        tile_e = _pick_tile_e(C_out, Ce_in, in_itemsize, out_itemsize, budget)
        # >= ~8 grid steps for large E (v7x two-TC sharding + pipeline depth),
        # but never below 512 rows (per-step overhead ~0.35 us).
        tile_e = min(tile_e, max(512, -(-E // 8)))
    tile_e = min(int(tile_e), _round_up(E, row_align))
    tile_e = max(row_align, _round_up(tile_e, row_align))

    grid = (pl.cdiv(E, tile_e),)                 # ragged last block: Pallas masks stores
    est = _vmem_bytes(tile_e, C_out, Ce_in, in_itemsize, out_itemsize)
    vmem_limit = int(min(max(est + (4 << 20), 8 << 20), ceiling))

    out = pl.pallas_call(
        edge_mlp_kernel,
        out_shape=jax.ShapeDtypeStruct((E, C_out), out_dtype),
        grid_spec=pltpu.PrefetchScalarGridSpec(
            num_scalar_prefetch=0,
            grid=grid,
            in_specs=[
                pl.BlockSpec((tile_e, C_out), lambda i: (i, 0)),   # pre-projected nodes
                pl.BlockSpec((tile_e, Ce_in), lambda i: (i, 0)),   # edge_attr
                pl.BlockSpec((Ce_in, C_out), lambda i: (0, 0)),    # W3 (grid-invariant)
                pl.BlockSpec((1, C_out), lambda i: (0, 0)),        # folded bias (f32)
            ],
            out_specs=pl.BlockSpec((tile_e, C_out), lambda i: (i, 0)),
        ),
        compiler_params=pltpu.CompilerParams(
            dimension_semantics=("parallel",),
            vmem_limit_bytes=vmem_limit),
    )(pre, ea, w3, bias)

    return out


def reference_forward(x, edge_index, edge_attr, params, eps=1e-5):
    row, col = edge_index[0], edge_index[1]
    feat = jnp.concatenate([x[row], x[col], edge_attr], axis=-1)
    z = feat @ params["w"] + params["b"]
    z = (z - params["mean"]) * jax.lax.rsqrt(params["var"] + eps) \
        * params["gamma"] + params["beta"]
    return jnp.maximum(z, 0.0)


if __name__ == "__main__":
    # Small deterministic shapes consistent with the module.
    N_nodes = 8            # number of graph vertices
    Cv = 4                 # vertex_channels
    Ce_in = 8              # edge_in_channels
    Ce_out = 32            # edge_out_channels
    E = 16                 # number of edges
    F_in = 2 * Cv + Ce_in  # Linear in_features

    key = jax.random.PRNGKey(0)
    kx, ke, kidx, kw, kb, kg, kbeta, km, kv = jax.random.split(key, 9)

    x = jax.random.normal(kx, (N_nodes, Cv), dtype=jnp.float32)
    edge_attr = jax.random.normal(ke, (E, Ce_in), dtype=jnp.float32)
    edge_index = jax.random.randint(kidx, (2, E), 0, N_nodes, dtype=jnp.int32)

    # Deterministic synthetic parameters (PyTorch Linear weight is (out,in);
    # stored transposed as (in, out) for the kernel matmul).
    params = {
        "w":     0.1 * jax.random.normal(kw, (F_in, Ce_out), dtype=jnp.float32),
        "b":     0.1 * jax.random.normal(kb, (Ce_out,), dtype=jnp.float32),
        "gamma": 1.0 + 0.1 * jax.random.normal(kg, (Ce_out,), dtype=jnp.float32),
        "beta":  0.1 * jax.random.normal(kbeta, (Ce_out,), dtype=jnp.float32),
        "mean":  0.1 * jax.random.normal(km, (Ce_out,), dtype=jnp.float32),
        "var":   jnp.abs(jax.random.normal(kv, (Ce_out,), dtype=jnp.float32)) + 0.5,
    }

    ref = reference_forward(x, edge_index, edge_attr, params)

    # f32 path (tight tolerance; BN folding / matmul split change rounding only).
    out_f32 = jax.block_until_ready(
        edge_mlp_forward(x, edge_index, edge_attr, params,
                         compute_dtype=jnp.float32))
    assert out_f32.shape == (E, Ce_out) and out_f32.dtype == jnp.float32
    assert jnp.allclose(out_f32, ref, atol=1e-4, rtol=1e-4), "f32 mismatch vs reference"

    # bf16 path (halved HBM traffic on v6e/v7x; loose tolerance).
    out_bf16 = jax.block_until_ready(
        edge_mlp_forward(x, edge_index, edge_attr, params,
                         compute_dtype=jnp.bfloat16))
    assert out_bf16.shape == (E, Ce_out) and out_bf16.dtype == jnp.bfloat16
    assert jnp.allclose(out_bf16.astype(jnp.float32), ref, atol=1e-1, rtol=1e-1), \
        "bf16 mismatch vs reference"

    # Mixed path: f32 inputs/compute, bf16 writeback (out_dtype knob).
    out_mixed = jax.block_until_ready(
        edge_mlp_forward(x, edge_index, edge_attr, params,
                         compute_dtype=jnp.float32, out_dtype=jnp.bfloat16))
    assert out_mixed.shape == (E, Ce_out) and out_mixed.dtype == jnp.bfloat16
    assert jnp.allclose(out_mixed.astype(jnp.float32), ref, atol=1e-1, rtol=1e-1), \
        "mixed-dtype mismatch vs reference"

    print("KERNEL_OK")
</pallas_src>

<mosaic_0001>
module attributes {stable_mosaic.version = 11 : i64} {
  func.func @edge_mlp_kernel(%arg0: i32, %arg1: memref<16x32xf32, #tpu.memory_space<vmem>>, %arg2: memref<16x8xf32, #tpu.memory_space<vmem>>, %arg3: memref<8x32xf32, #tpu.memory_space<vmem>>, %arg4: memref<1x32xf32, #tpu.memory_space<vmem>>, %arg5: memref<16x32xf32, #tpu.memory_space<vmem>>) attributes {dimension_semantics = [#tpu.dimension_semantics<parallel>], iteration_bounds = array<i64: 1>, scalar_prefetch = 0 : i64, scratch_operands = 0 : i64, tpu.core_type = #tpu.core_type<tc>, window_params = [{transform_indices = @transform_0, window_bounds = array<i64: 16, 32>}, {transform_indices = @transform_1, window_bounds = array<i64: 16, 8>}, {pipeline_mode = #tpu.pipeline_mode<synchronous>, transform_indices = @transform_2, window_bounds = array<i64: 8, 32>}, {pipeline_mode = #tpu.pipeline_mode<synchronous>, transform_indices = @transform_3, window_bounds = array<i64: 1, 32>}, {transform_indices = @transform_4, window_bounds = array<i64: 16, 32>}]} {
    %c0 = arith.constant 0 : index
    %c0_0 = arith.constant 0 : index
    %0 = vector.load %arg2[%c0, %c0_0] : memref<16x8xf32, #tpu.memory_space<vmem>>, vector<16x8xf32>
    %c0_1 = arith.constant 0 : index
    %c0_2 = arith.constant 0 : index
    %1 = vector.load %arg3[%c0_1, %c0_2] : memref<8x32xf32, #tpu.memory_space<vmem>>, vector<8x32xf32>
    %cst = arith.constant dense<0.000000e+00> : vector<16x32xf32>
    %2 = tpu.matmul %0, %1, %cst {dimension_numbers = #tpu.dot_dimension_numbers<[1], [0], [0], [1], [0, 0, 1, 1], [], []>} : vector<16x8xf32>, vector<8x32xf32>, vector<16x32xf32> -> vector<16x32xf32>
    %c0_3 = arith.constant 0 : index
    %c0_4 = arith.constant 0 : index
    %3 = vector.load %arg1[%c0_3, %c0_4] : memref<16x32xf32, #tpu.memory_space<vmem>>, vector<16x32xf32>
    %4 = arith.addf %2, %3 : vector<16x32xf32>
    %c0_5 = arith.constant 0 : index
    %c0_6 = arith.constant 0 : index
    %5 = vector.load %arg4[%c0_5, %c0_6] : memref<1x32xf32, #tpu.memory_space<vmem>>, vector<1x32xf32>
    %6 = vector.broadcast %5 : vector<1x32xf32> to vector<16x32xf32>
    %7 = arith.addf %4, %6 : vector<16x32xf32>
    %cst_7 = arith.constant 0.000000e+00 : f32
    %8 = vector.broadcast %cst_7 : f32 to vector<16x32xf32>
    %9 = arith.maximumf %7, %8 : vector<16x32xf32>
    %c0_8 = arith.constant 0 : index
    %c0_9 = arith.constant 0 : index
    %10 = vector.load %arg5[%c0_8, %c0_9] : memref<16x32xf32, #tpu.memory_space<vmem>>, vector<16x32xf32>
    tpu.vector_store %arg5[%c0_8, %c0_9], %9 {strides = array<i32>} : memref<16x32xf32, #tpu.memory_space<vmem>>, vector<16x32xf32>,
    return
  }
  func.func @transform_0(%arg0: i32) -> (i32, i32) {
    %c0_i32 = arith.constant 0 : i32
    %c0_i32_0 = arith.constant 0 : i32
    return %arg0, %c0_i32 : i32, i32
  }
  func.func @transform_1(%arg0: i32) -> (i32, i32) {
    %c0_i32 = arith.constant 0 : i32
    %c0_i32_0 = arith.constant 0 : i32
    return %arg0, %c0_i32 : i32, i32
  }
  func.func @transform_2(%arg0: i32) -> (i32, i32) {
    %c0_i32 = arith.constant 0 : i32
    %c0_i32_0 = arith.constant 0 : i32
    %c0_i32_1 = arith.constant 0 : i32
    return %c0_i32, %c0_i32_0 : i32, i32
  }
  func.func @transform_3(%arg0: i32) -> (i32, i32) {
    %c0_i32 = arith.constant 0 : i32
    %c0_i32_0 = arith.constant 0 : i32
    %c0_i32_1 = arith.constant 0 : i32
    return %c0_i32, %c0_i32_0 : i32, i32
  }
  func.func @transform_4(%arg0: i32) -> (i32, i32) {
    %c0_i32 = arith.constant 0 : i32
    %c0_i32_0 = arith.constant 0 : i32
    return %arg0, %c0_i32 : i32, i32
  }
}

</mosaic_0001>

<llo_original>
// kernel: tpu_custom_call.1
$region0: #{tpu_custom_call.1}
  #allocation0 [shape = 'u32[]', space=smem, size = 0x4, offset = 0x4, fixed_abs, tag = 'smem constant byte address 0x4 - core index']
  #allocation1 [shape = 'u32[144,128]{1,0:T(1,128)}', space=vmem, size = 0x12000, scoped, tag = 'internal scratch']
  %s0 = inlined_call_operand.vmem [shape: f32[16,32], index: 0, kind: input, shape index: {}]
  %s1 = inlined_call_operand.vmem [shape: f32[16,8], index: 1, kind: input, shape index: {}]
  %s2 = inlined_call_operand.vmem [shape: f32[8,32], index: 2, kind: input, shape index: {}]
  %s3 = inlined_call_operand.vmem [shape: f32[1,32], index: 3, kind: input, shape index: {}]
  %s4 = inlined_call_operand.hbm [shape: f32[16,32], index: 4, kind: output, shape index: {}]
  %s5 = sld [smem:[#allocation0]]
  $region26: #{tpu_custom_call.1} parent=0
    _
  %s7 = ssub.s32 1, %s5
  %s8 = scalar_select 0, %s7, %s5
  $region1: #{tpu_custom_call.1} parent=0
    #allocation2 [shape = 'u8[8192]{0}', space=vmem, size = 0x2000, scoped, tag = 'output window, operand 0, single buffered']
    #allocation3 [shape = 's32[1]{0}', space=sflag, size = 0x4, scoped, tag = 'scoped memory for tpu_custom_call.1']
    %9 = vsyncpa [#allocation3], 0
    // Predicated region
    $region2: #{tpu_custom_call.1} parent=1 // pred_check
      _
    $region3: #{tpu_custom_call.1} parent=1 // pred_check_branch
      %11 = sbr.rel (0) target = $region5
    $region4: #{tpu_custom_call.1} parent=1 // pred_region
      _
    $region5: #{tpu_custom_call.1} parent=1 // pred_fallthru
      _
    // Predicated region
    $region6: #{tpu_custom_call.1} parent=1 // pred_check
      _
    $region7: #{tpu_custom_call.1} parent=1 // pred_check_branch
      %13 = sbr.rel (0) target = $region9
    $region8: #{tpu_custom_call.1} parent=1 // pred_region
      _
    $region9: #{tpu_custom_call.1} parent=1 // pred_fallthru
      _
    // Predicated region
    $region10: #{tpu_custom_call.1} parent=1 // pred_check
      _
    $region11: #{tpu_custom_call.1} parent=1 // pred_check_branch
      %15 = sbr.rel (0) target = $region13
    $region12: #{tpu_custom_call.1} parent=1 // pred_region
      _
    $region13: #{tpu_custom_call.1} parent=1 // pred_fallthru
      _
    // Predicated region
    $region14: #{tpu_custom_call.1} parent=1 // pred_check
      _
    $region15: #{tpu_custom_call.1} parent=1 // pred_check_branch
      %17 = sbr.rel (0) target = $region17
    $region16: #{tpu_custom_call.1} parent=1 // pred_region
      _
    $region17: #{tpu_custom_call.1} parent=1 // pred_fallthru
      _
    %v18 = vld [vmem:[%s1] sm:$0xff]
    %v19 = vld [vmem:[%s1 + $0x8] sm:$0xff]
    %v20 = vld [vmem:[%s2] sm:$0xff]
    %v21 = vld [vmem:[%s0] sm:$0xff]
    %v22 = vld [vmem:[%s0 + $0x8] sm:$0xff]
    %vm23 = vcmask 64512
    %v25 = vsel %vm23, %v18, 0
    %v28 = vsel %vm23, %v19, 0
    %30 = vmatprep.subr.mxu0 0.0
    %31 = vmatpush1.msra.mxu0 0.0
    %32 = vmatprep.subr.mxu0 0.0
    %33 = vmatpush1.msra.mxu0 0.0
    %34 = vmatprep.subr.mxu0 0.0
    %35 = vmatpush1.msra.mxu0 0.0
    %36 = vmatprep.subr.mxu0 0.0
    %37 = vmatpush1.msra.mxu0 0.0
    %38 = vmatprep.subr.mxu0 0.0
    %39 = vmatpush1.msra.mxu0 0.0
    %40 = vmatprep.subr.mxu0 0.0
    %41 = vmatpush1.msra.mxu0 0.0
    %42 = vmatprep.subr.mxu0 0.0
    %43 = vmatpush1.msra.mxu0 0.0
    %44 = vmatprep.subr.mxu0 0.0
    %45 = vmatpush1.msra.mxu0 0.0
    %46 = vmatprep.subr.mxu0 0.0
    %47 = vmatpush1.msra.mxu0 0.0
    %48 = vmatprep.subr.mxu0 0.0
    %49 = vmatpush1.msra.mxu0 0.0
    %50 = vmatprep.subr.mxu0 0.0
    %51 = vmatpush1.msra.mxu0 0.0
    %52 = vmatprep.subr.mxu0 0.0
    %53 = vmatpush1.msra.mxu0 0.0
    %54 = vmatprep.subr.mxu0 0.0
    %55 = vmatpush1.msra.mxu0 0.0
    %56 = vmatprep.subr.mxu0 0.0
    %57 = vmatpush1.msra.mxu0 0.0
    %58 = vmatprep.subr.mxu0 0.0
    %59 = vmatpush1.msra.mxu0 0.0
    %60 = vmatprep.subr.mxu0 0.0
    %61 = vmatpush1.msra.mxu0 %v20
    %62 = vmatprep.subr.mxu0 0.0
    %63 = vmatpush2.msra.mxu0 0.0
    %64 = vmatprep.subr.mxu0 0.0
    %65 = vmatpush2.msra.mxu0 0.0
    %66 = vmatprep.subr.mxu0 0.0
    %67 = vmatpush2.msra.mxu0 0.0
    %68 = vmatprep.subr.mxu0 0.0
    %69 = vmatpush2.msra.mxu0 0.0
    %70 = vmatprep.subr.mxu0 0.0
    %71 = vmatpush2.msra.mxu0 0.0
    %72 = vmatprep.subr.mxu0 0.0
    %73 = vmatpush2.msra.mxu0 0.0
    %74 = vmatprep.subr.mxu0 0.0
    %75 = vmatpush2.msra.mxu0 0.0
    %76 = vmatprep.subr.mxu0 0.0
    %77 = vmatpush2.msra.mxu0 0.0
    %78 = vmatprep.subr.mxu0 0.0
    %79 = vmatpush2.msra.mxu0 0.0
    %80 = vmatprep.subr.mxu0 0.0
    %81 = vmatpush2.msra.mxu0 0.0
    %82 = vmatprep.subr.mxu0 0.0
    %83 = vmatpush2.msra.mxu0 0.0
    %84 = vmatprep.subr.mxu0 0.0
    %85 = vmatpush2.msra.mxu0 0.0
    %86 = vmatprep.subr.mxu0 0.0
    %87 = vmatpush2.msra.mxu0 0.0
    %88 = vmatprep.subr.mxu0 0.0
    %89 = vmatpush2.msra.mxu0 0.0
    %90 = vmatprep.subr.mxu0 0.0
    %91 = vmatpush2.msra.mxu0 0.0
    %92 = vmatprep.subr.mxu0 0.0
    %93 = vmatpush2.msra.mxu0 0.0
    %94 = vmatprep.mubr.f32.mxu0 0.0
    %95 = vmatmul.mubr.f32.gmra.mxu0 %v25
    %v96 = vpop.f32.mrf.mxu0
    %v97 = vadd.f32 %v21, %v96
    %v98 = vpop.f32.mrf.mxu0
    %99 = vmatprep.mubr.f32.mxu0 0.0
    %100 = vmatmul.mubr.f32.gmra.mxu0 %v28
    %v101 = vpop.f32.mrf.mxu0
    %v102 = vadd.f32 %v22, %v101
    %v103 = vpop.f32.mrf.mxu0
    %104 = vdwg.mxu0
    %v105 = vld [vmem:[%s3] sm:$0x1]
    %v107 = vlaneseq
    %v108 = vshrl.u32 %v107, 7
    %v109 = vsub.s32 0, %v108
    %v110 = vrot.slane %v105, %v109
    %v112 = vadd.f32 %v97, %v110
    %v113 = vadd.f32 %v102, %v110
    %v114 = vmax.f32 %v112, 0.0
    %v115 = vmax.f32 %v113, 0.0
    %vm116 = vcmask 261120
    %117 = vst.msk [vmem:[#allocation2] sm:$0xff] %vm116, %v114
    %118 = vst.msk [vmem:[#allocation2 + $0x8] sm:$0xff] %vm116, %v115
    // Predicated region
    $region18: #{tpu_custom_call.1} parent=1 // pred_check
      _
    $region19: #{tpu_custom_call.1} parent=1 // pred_check_branch
      %120 = sbr.rel (0) target = $region21
    $region20: #{tpu_custom_call.1} parent=1 // pred_region
      %s122 = ssub.s32 256, 256
      %123 = vsyncadd [#allocation3], %s122
      %s124 = sshll.u32 [#allocation2], 4
      %s125 = int_to_ptr.vmem [resolvable:$true] %s124
      %130 = dma.vmem_to_hbm [thread:$0]  %s125, 256, %s4, [#allocation3], 128, 128, 8
    $region21: #{tpu_custom_call.1} parent=1 // pred_fallthru
      _
    // Predicated region
    $region22: #{tpu_custom_call.1} parent=1 // pred_check
      _
    $region23: #{tpu_custom_call.1} parent=1 // pred_check_branch
      %132 = sbr.rel (0) target = $region25
    $region24: #{tpu_custom_call.1} parent=1 // pred_region
      %133 = dma.done [#allocation3], 256
    $region25: #{tpu_custom_call.1} parent=1 // pred_fallthru
      _
    %134 = vsyncpa [#allocation3], 1

</llo_original>
